<compile_context>
chip_gen: v7x
topology: tpu7x:2x2x1
jax: 0.10.0
libtpu: 0.0.40
codegen_flags: <defaults>
</compile_context>

<pallas_src>
import jax
import jax.numpy as jnp
from jax.experimental import pallas as pl
from jax.experimental.pallas import tpu as pltpu


# ---------------------------------------------------------------------------
# Helpers
# ---------------------------------------------------------------------------
def _full_spec(a):
    """Whole-array-resident BlockSpec (no grid -> zero-arg index_map)."""
    return pl.BlockSpec(a.shape, lambda: (0,) * a.ndim)


def _log_softmax(logits):
    m = jnp.max(logits, axis=1, keepdims=True)
    shifted = logits - m
    lse = jnp.log(jnp.sum(jnp.exp(shifted), axis=1, keepdims=True))
    return shifted - lse


# ---------------------------------------------------------------------------
# Single-step kernel (matches RNN.forward exactly)
# ---------------------------------------------------------------------------
def _rnn_cell_kernel(x_ref, h_ref, wi_ref, wh_ref, b_ih_ref, w_ho_ref, b_ho_ref,
                     out_ref, h_out_ref):
    # x:[B,I] h:[B,H] wi:[I,H] wh:[H,H] b_ih:[1,H] w_ho:[H,O] b_ho:[1,O]
    pre = (jnp.dot(x_ref[...], wi_ref[...], preferred_element_type=jnp.float32)
           + jnp.dot(h_ref[...], wh_ref[...], preferred_element_type=jnp.float32)
           + b_ih_ref[...])
    h_new = jnp.tanh(pre)
    h_out_ref[...] = h_new.astype(h_out_ref.dtype)

    logits = (jnp.dot(h_new, w_ho_ref[...], preferred_element_type=jnp.float32)
              + b_ho_ref[...])
    out_ref[...] = _log_softmax(logits).astype(out_ref.dtype)


def rnn_forward(params, x, h):
    """One RNN step: (log_softmax_output [B,O], new_hidden [B,H])."""
    B = x.shape[0]
    H = params["wh_t"].shape[0]
    O = params["w_ho"].shape[1]
    args = (x, h, params["wi_t"], params["wh_t"], params["b_ih"],
            params["w_ho"], params["b_ho"])
    return pl.pallas_call(
        _rnn_cell_kernel,
        out_shape=(jax.ShapeDtypeStruct((B, O), jnp.float32),
                   jax.ShapeDtypeStruct((B, H), jnp.float32)),
        in_specs=[_full_spec(a) for a in args],
        out_specs=(pl.BlockSpec((B, O), lambda: (0, 0)),
                   pl.BlockSpec((B, H), lambda: (0, 0))),
    )(*args)


# ---------------------------------------------------------------------------
# Fused-sequence kernel: T timesteps, ONE kernel invocation, no grid.
#   - batched input projection before the recurrence
#   - serial loop only does h@Wh + tanh (fully unrolled, static T)
#   - batched output head + log_softmax after the loop (one slab store)
# ---------------------------------------------------------------------------
def _rnn_seq_kernel(h0_ref, x_all_ref, wi_ref, wh_ref, b_ih_ref, w_ho_ref,
                    b_ho_ref, out_ref, h_out_ref, hs_scratch):
    TB, _ = hs_scratch.shape
    B = h0_ref.shape[0]
    T = TB // B                      # static Python int (shapes are static)

    # Hoisted (loaded/broadcast once, reused across the unrolled loop).
    b_ih = b_ih_ref[...]
    b_ho = b_ho_ref[...]
    wh = wh_ref[...]

    # (1) One batched input projection for ALL timesteps: [T*B, H].
    xproj = (jnp.dot(x_all_ref[...], wi_ref[...],
                     preferred_element_type=jnp.float32) + b_ih)

    # (2) Serial recurrence — only the H x H matmul + tanh is sequential.
    h = h0_ref[...]
    for t in range(T):               # T is tiny and static: full unroll
        h = jnp.tanh(jnp.dot(h, wh, preferred_element_type=jnp.float32)
                     + xproj[t * B:(t + 1) * B, :])
        hs_scratch[t * B:(t + 1) * B, :] = h
    h_out_ref[...] = h.astype(h_out_ref.dtype)   # final hidden, written once

    # (3) Batched output head + log_softmax over all T*B rows, one slab store.
    logits = (jnp.dot(hs_scratch[...], w_ho_ref[...],
                      preferred_element_type=jnp.float32) + b_ho)
    out_ref[...] = _log_softmax(logits).astype(out_ref.dtype)


def rnn_sequence(params, xs, h0):
    """Run T steps in one kernel. xs:[T,B,I], h0:[B,H] ->
    (outputs [T,B,O], final hidden [B,H])."""
    T, B, I = xs.shape
    H = h0.shape[1]
    O = params["w_ho"].shape[1]

    x_all = xs.reshape(T * B, I)     # row-major metadata reshape (free)
    args = (h0, x_all, params["wi_t"], params["wh_t"], params["b_ih"],
            params["w_ho"], params["b_ho"])

    outs_flat, h_fin = pl.pallas_call(
        _rnn_seq_kernel,
        out_shape=(jax.ShapeDtypeStruct((T * B, O), jnp.float32),
                   jax.ShapeDtypeStruct((B, H), jnp.float32)),
        in_specs=[_full_spec(a) for a in args],
        out_specs=(pl.BlockSpec((T * B, O), lambda: (0, 0)),
                   pl.BlockSpec((B, H), lambda: (0, 0))),
        scratch_shapes=[pltpu.VMEM((T * B, H), jnp.float32)],  # hidden history
    )(*args)
    return outs_flat.reshape(T, B, O), h_fin


# ---------------------------------------------------------------------------
# Parameters
# ---------------------------------------------------------------------------
def init_params(key, input_size, hidden_size, output_size):
    """PyTorch-style raw params: Linear weight [out,in], bias [out]."""
    ks = jax.random.split(key, 6)

    def lin(kw, kb, fan_in, fan_out):
        bound = 1.0 / jnp.sqrt(fan_in)
        w = jax.random.uniform(kw, (fan_out, fan_in), jnp.float32, -bound, bound)
        b = jax.random.uniform(kb, (fan_out,), jnp.float32, -bound, bound)
        return w, b

    wi, bi = lin(ks[0], ks[1], input_size, hidden_size)   # i2h
    wh, bh = lin(ks[2], ks[3], hidden_size, hidden_size)  # h2h
    wo, bo = lin(ks[4], ks[5], hidden_size, output_size)  # h2o
    return dict(wi=wi, bi=bi, wh=wh, bh=bh, wo=wo, bo=bo)


def prepare_params(raw):
    """One-time layout transform (NOT per forward call): transpose to [in,out],
    pre-sum the two recurrence biases, reshape biases to [1,N]."""
    return dict(
        wi_t=raw["wi"].T,                          # [I, H]
        wh_t=raw["wh"].T,                          # [H, H]
        b_ih=(raw["bi"] + raw["bh"])[None, :],     # [1, H] pre-summed
        w_ho=raw["wo"].T,                          # [H, O]
        b_ho=raw["bo"][None, :],                   # [1, O]
    )


# ---------------------------------------------------------------------------
if __name__ == "__main__":
    input_size, hidden_size, output_size = 16, 32, 8
    batch, seq_len = 2, 8

    key = jax.random.PRNGKey(0)
    kx, ks, kp = jax.random.split(key, 3)
    raw = init_params(kp, input_size, hidden_size, output_size)
    params = prepare_params(raw)

    x = jax.random.normal(kx, (batch, input_size), jnp.float32)
    xs = jax.random.normal(ks, (seq_len, batch, input_size), jnp.float32)
    h0 = jnp.zeros((batch, hidden_size), jnp.float32)

    # ---- single step (matches RNN.forward) ----
    out, h1 = rnn_forward(params, x, h0)
    jax.block_until_ready((out, h1))

    # Pure-JAX reference from UNFUSED PyTorch-style params
    pre = x @ raw["wi"].T + raw["bi"] + h0 @ raw["wh"].T + raw["bh"]
    h_ref = jnp.tanh(pre)
    logits = h_ref @ raw["wo"].T + raw["bo"]
    out_ref = jax.nn.log_softmax(logits, axis=1)
    assert jnp.allclose(out, out_ref, atol=1e-5), "step output mismatch"
    assert jnp.allclose(h1, h_ref, atol=1e-5), "step hidden mismatch"

    # ---- fused sequence (T steps in one pallas_call, no grid) ----
    outs, h_fin = rnn_sequence(params, xs, h0)
    jax.block_until_ready((outs, h_fin))

    h_r = h0
    outs_ref = []
    for t in range(seq_len):
        pre = xs[t] @ raw["wi"].T + raw["bi"] + h_r @ raw["wh"].T + raw["bh"]
        h_r = jnp.tanh(pre)
        outs_ref.append(jax.nn.log_softmax(h_r @ raw["wo"].T + raw["bo"], axis=1))
    outs_ref = jnp.stack(outs_ref, axis=0)
    assert jnp.allclose(outs, outs_ref, atol=1e-4), "sequence output mismatch"
    assert jnp.allclose(h_fin, h_r, atol=1e-4), "sequence hidden mismatch"

    print("KERNEL_OK")
</pallas_src>

<mosaic_0001>
module attributes {stable_mosaic.version = 11 : i64} {
  func.func @_rnn_cell_kernel(%arg0: memref<2x16xf32, #tpu.memory_space<vmem>>, %arg1: memref<2x32xf32, #tpu.memory_space<vmem>>, %arg2: memref<16x32xf32, #tpu.memory_space<vmem>>, %arg3: memref<32x32xf32, #tpu.memory_space<vmem>>, %arg4: memref<1x32xf32, #tpu.memory_space<vmem>>, %arg5: memref<32x8xf32, #tpu.memory_space<vmem>>, %arg6: memref<1x8xf32, #tpu.memory_space<vmem>>, %arg7: memref<2x8xf32, #tpu.memory_space<vmem>>, %arg8: memref<2x32xf32, #tpu.memory_space<vmem>>) attributes {dimension_semantics = [], scalar_prefetch = 0 : i64, scratch_operands = 0 : i64, tpu.core_type = #tpu.core_type<tc>} {
    %c0 = arith.constant 0 : index
    %c0_0 = arith.constant 0 : index
    %0 = vector.load %arg0[%c0, %c0_0] : memref<2x16xf32, #tpu.memory_space<vmem>>, vector<2x16xf32>
    %c0_1 = arith.constant 0 : index
    %c0_2 = arith.constant 0 : index
    %1 = vector.load %arg2[%c0_1, %c0_2] : memref<16x32xf32, #tpu.memory_space<vmem>>, vector<16x32xf32>
    %cst = arith.constant dense<0.000000e+00> : vector<2x32xf32>
    %2 = tpu.matmul %0, %1, %cst {dimension_numbers = #tpu.dot_dimension_numbers<[1], [0], [0], [1], [0, 0, 1, 1], [], []>} : vector<2x16xf32>, vector<16x32xf32>, vector<2x32xf32> -> vector<2x32xf32>
    %c0_3 = arith.constant 0 : index
    %c0_4 = arith.constant 0 : index
    %3 = vector.load %arg1[%c0_3, %c0_4] : memref<2x32xf32, #tpu.memory_space<vmem>>, vector<2x32xf32>
    %c0_5 = arith.constant 0 : index
    %c0_6 = arith.constant 0 : index
    %4 = vector.load %arg3[%c0_5, %c0_6] : memref<32x32xf32, #tpu.memory_space<vmem>>, vector<32x32xf32>
    %cst_7 = arith.constant dense<0.000000e+00> : vector<2x32xf32>
    %5 = tpu.matmul %3, %4, %cst_7 {dimension_numbers = #tpu.dot_dimension_numbers<[1], [0], [0], [1], [0, 0, 1, 1], [], []>} : vector<2x32xf32>, vector<32x32xf32>, vector<2x32xf32> -> vector<2x32xf32>
    %6 = arith.addf %2, %5 : vector<2x32xf32>
    %c0_8 = arith.constant 0 : index
    %c0_9 = arith.constant 0 : index
    %7 = vector.load %arg4[%c0_8, %c0_9] : memref<1x32xf32, #tpu.memory_space<vmem>>, vector<1x32xf32>
    %8 = vector.broadcast %7 : vector<1x32xf32> to vector<2x32xf32>
    %9 = arith.addf %6, %8 : vector<2x32xf32>
    %10 = math.tanh %9 : vector<2x32xf32>
    %c0_10 = arith.constant 0 : index
    %c0_11 = arith.constant 0 : index
    %11 = vector.load %arg8[%c0_10, %c0_11] : memref<2x32xf32, #tpu.memory_space<vmem>>, vector<2x32xf32>
    tpu.vector_store %arg8[%c0_10, %c0_11], %10 {strides = array<i32>} : memref<2x32xf32, #tpu.memory_space<vmem>>, vector<2x32xf32>,
    %c0_12 = arith.constant 0 : index
    %c0_13 = arith.constant 0 : index
    %12 = vector.load %arg5[%c0_12, %c0_13] : memref<32x8xf32, #tpu.memory_space<vmem>>, vector<32x8xf32>
    %cst_14 = arith.constant dense<0.000000e+00> : vector<2x8xf32>
    %13 = tpu.matmul %10, %12, %cst_14 {dimension_numbers = #tpu.dot_dimension_numbers<[1], [0], [0], [1], [0, 0, 1, 1], [], []>} : vector<2x32xf32>, vector<32x8xf32>, vector<2x8xf32> -> vector<2x8xf32>
    %c0_15 = arith.constant 0 : index
    %c0_16 = arith.constant 0 : index
    %14 = vector.load %arg6[%c0_15, %c0_16] : memref<1x8xf32, #tpu.memory_space<vmem>>, vector<1x8xf32>
    %15 = vector.broadcast %14 : vector<1x8xf32> to vector<2x8xf32>
    %16 = arith.addf %13, %15 : vector<2x8xf32>
    %cst_17 = arith.constant dense<0xFF800000> : vector<2xf32>
    %17 = vector.multi_reduction <maximumf>, %16, %cst_17 [1] : vector<2x8xf32> to vector<2xf32>
    %18 = vector.shape_cast %17 : vector<2xf32> to vector<2x1xf32>
    %19 = vector.broadcast %18 : vector<2x1xf32> to vector<2x8xf32>
    %20 = arith.subf %16, %19 : vector<2x8xf32>
    %21 = math.exp %20 : vector<2x8xf32>
    %cst_18 = arith.constant dense<0.000000e+00> : vector<2xf32>
    %22 = vector.multi_reduction <add>, %21, %cst_18 [1] : vector<2x8xf32> to vector<2xf32>
    %23 = vector.shape_cast %22 : vector<2xf32> to vector<2x1xf32>
    %24 = math.log %23 : vector<2x1xf32>
    %25 = vector.broadcast %24 : vector<2x1xf32> to vector<2x8xf32>
    %26 = arith.subf %20, %25 : vector<2x8xf32>
    %c0_19 = arith.constant 0 : index
    %c0_20 = arith.constant 0 : index
    %27 = vector.load %arg7[%c0_19, %c0_20] : memref<2x8xf32, #tpu.memory_space<vmem>>, vector<2x8xf32>
    tpu.vector_store %arg7[%c0_19, %c0_20], %26 {strides = array<i32>} : memref<2x8xf32, #tpu.memory_space<vmem>>, vector<2x8xf32>,
    return
  }
}

</mosaic_0001>

<llo_original>
// kernel: tpu_custom_call.1
$region0: #{tpu_custom_call.1}
  #allocation0 [shape = 'u32[]', space=smem, size = 0x4, offset = 0x4, fixed_abs, tag = 'smem constant byte address 0x4 - core index']
  #allocation1 [shape = 'u32[144,128]{1,0:T(1,128)}', space=vmem, size = 0x12000, scoped, tag = 'internal scratch']
  %s0 = inlined_call_operand.vmem [shape: f32[2,16], index: 0, kind: input, shape index: {}]
  %s1 = inlined_call_operand.hbm [shape: f32[2,32], index: 1, kind: input, shape index: {}]
  %s2 = inlined_call_operand.vmem [shape: f32[16,32], index: 2, kind: input, shape index: {}]
  %s3 = inlined_call_operand.vmem [shape: f32[32,32], index: 3, kind: input, shape index: {}]
  %s4 = inlined_call_operand.hbm [shape: f32[1,32], index: 4, kind: input, shape index: {}]
  %s5 = inlined_call_operand.vmem [shape: f32[32,8], index: 5, kind: input, shape index: {}]
  %s6 = inlined_call_operand.vmem [shape: f32[1,8], index: 6, kind: input, shape index: {}]
  %s7 = inlined_call_operand.hbm [shape: f32[2,8], index: 7, kind: output, shape index: {0}]
  %s8 = inlined_call_operand.hbm [shape: f32[2,32], index: 8, kind: output, shape index: {1}]
  %9 = xla_tuple %s7, %s8
  %s10 = sld [smem:[#allocation0]]
  $region54: #{tpu_custom_call.1} parent=0
    _
  %s12 = ssub.s32 1, %s10
  %s13 = scalar_select 0, %s12, %s10
  $region1: #{tpu_custom_call.1} parent=0
    #allocation2 [shape = 'u8[1024]{0}', space=vmem, size = 0x400, scoped, tag = 'input window, operand 1, single buffered']
    #allocation3 [shape = 's32[1]{0}', space=sflag, size = 0x4, scoped, tag = 'scoped memory for tpu_custom_call.1']
    #allocation4 [shape = 's32[1]{0}', space=sflag, size = 0x4, scoped, tag = 'scoped memory for tpu_custom_call.1']
    #allocation5 [shape = 'u8[512]{0}', space=vmem, size = 0x400, scoped, tag = 'input window, operand 4, single buffered']
    #allocation6 [shape = 's32[1]{0}', space=sflag, size = 0x4, scoped, tag = 'scoped memory for tpu_custom_call.1']
    #allocation7 [shape = 'u8[1024]{0}', space=vmem, size = 0x400, scoped, tag = 'output window, operand 0, single buffered']
    #allocation8 [shape = 'u8[1024]{0}', space=vmem, size = 0x400, scoped, tag = 'output window, operand 1, single buffered']
    #allocation9 [shape = 's32[1]{0}', space=sflag, size = 0x4, scoped, tag = 'scoped memory for tpu_custom_call.1']
    %14 = vsyncpa [#allocation3], 0
    %15 = vsyncpa [#allocation6], 0
    %16 = vsyncpa [#allocation4], 0
    %17 = vsyncpa [#allocation9], 0
    // Predicated region
    $region2: #{tpu_custom_call.1} parent=1 // pred_check
      _
    $region3: #{tpu_custom_call.1} parent=1 // pred_check_branch
      %19 = sbr.rel (0) target = $region5
    $region4: #{tpu_custom_call.1} parent=1 // pred_region
      _
    $region5: #{tpu_custom_call.1} parent=1 // pred_fallthru
      _
    // Predicated region
    $region6: #{tpu_custom_call.1} parent=1 // pred_check
      _
    $region7: #{tpu_custom_call.1} parent=1 // pred_check_branch
      %21 = sbr.rel (0) target = $region9
    $region8: #{tpu_custom_call.1} parent=1 // pred_region
      %s23 = ssub.s32 32, 32
      %24 = vsyncadd [#allocation3], %s23
      %s26 = sshll.u32 [#allocation2], 4
      %s27 = int_to_ptr.vmem [resolvable:$true] %s26
      %29 = dma.hbm_to_vmem [thread:$0]  %s1, 32, %s27, [#allocation3]
    $region9: #{tpu_custom_call.1} parent=1 // pred_fallthru
      _
    // Predicated region
    $region10: #{tpu_custom_call.1} parent=1 // pred_check
      _
    $region11: #{tpu_custom_call.1} parent=1 // pred_check_branch
      %31 = sbr.rel (0) target = $region13
    $region12: #{tpu_custom_call.1} parent=1 // pred_region
      _
    $region13: #{tpu_custom_call.1} parent=1 // pred_fallthru
      _
    // Predicated region
    $region14: #{tpu_custom_call.1} parent=1 // pred_check
      _
    $region15: #{tpu_custom_call.1} parent=1 // pred_check_branch
      %33 = sbr.rel (0) target = $region17
    $region16: #{tpu_custom_call.1} parent=1 // pred_region
      _
    $region17: #{tpu_custom_call.1} parent=1 // pred_fallthru
      _
    // Predicated region
    $region18: #{tpu_custom_call.1} parent=1 // pred_check
      _
    $region19: #{tpu_custom_call.1} parent=1 // pred_check_branch
      %35 = sbr.rel (0) target = $region21
    $region20: #{tpu_custom_call.1} parent=1 // pred_region
      %s37 = ssub.s32 16, 16
      %38 = vsyncadd [#allocation6], %s37
      %s40 = sshll.u32 [#allocation5], 4
      %s41 = int_to_ptr.vmem [resolvable:$true] %s40
      %43 = dma.hbm_to_vmem [thread:$0]  %s4, 16, %s41, [#allocation6]
    $region21: #{tpu_custom_call.1} parent=1 // pred_fallthru
      _
    // Predicated region
    $region22: #{tpu_custom_call.1} parent=1 // pred_check
      _
    $region23: #{tpu_custom_call.1} parent=1 // pred_check_branch
      %45 = sbr.rel (0) target = $region25
    $region24: #{tpu_custom_call.1} parent=1 // pred_region
      _
    $region25: #{tpu_custom_call.1} parent=1 // pred_fallthru
      _
    // Predicated region
    $region26: #{tpu_custom_call.1} parent=1 // pred_check
      _
    $region27: #{tpu_custom_call.1} parent=1 // pred_check_branch
      %47 = sbr.rel (0) target = $region29
    $region28: #{tpu_custom_call.1} parent=1 // pred_region
      _
    $region29: #{tpu_custom_call.1} parent=1 // pred_fallthru
      _
    // Predicated region
    $region30: #{tpu_custom_call.1} parent=1 // pred_check
      _
    $region31: #{tpu_custom_call.1} parent=1 // pred_check_branch
      %49 = sbr.rel (0) target = $region33
    $region32: #{tpu_custom_call.1} parent=1 // pred_region
      %50 = dma.done [#allocation3], 32
    $region33: #{tpu_custom_call.1} parent=1 // pred_fallthru
      _
    // Predicated region
    $region34: #{tpu_custom_call.1} parent=1 // pred_check
      _
    $region35: #{tpu_custom_call.1} parent=1 // pred_check_branch
      %52 = sbr.rel (0) target = $region37
    $region36: #{tpu_custom_call.1} parent=1 // pred_region
      %53 = dma.done [#allocation6], 16
    $region37: #{tpu_custom_call.1} parent=1 // pred_fallthru
      _
    %v54 = vld [vmem:[%s0] sm:$0x3]
    %v55 = vld [vmem:[%s2] sm:$0xff]
    %v56 = vld [vmem:[%s2 + $0x8] sm:$0xff]
    %v57 = vld [vmem:[#allocation2] sm:$0x3]
    %v58 = vld [vmem:[%s3] sm:$0xff]
    %v59 = vld [vmem:[%s3 + $0x8] sm:$0xff]
    %v60 = vld [vmem:[%s3 + $0x10] sm:$0xff]
    %v61 = vld [vmem:[%s3 + $0x18] sm:$0xff]
    %vm62 = vcmask 261120
    %v64 = vsel %vm62, %v57, 0
    %66 = vmatprep.subr.mxu0 0.0
    %67 = vmatpush1.msra.mxu0 %v58
    %68 = vmatprep.subr.mxu0 0.0
    %69 = vmatpush1.msra.mxu0 %v59
    %70 = vmatprep.subr.mxu0 0.0
    %71 = vmatpush1.msra.mxu0 %v60
    %72 = vmatprep.subr.mxu0 0.0
    %73 = vmatpush1.msra.mxu0 %v61
    %74 = vmatprep.subr.mxu0 0.0
    %75 = vmatpush1.msra.mxu0 0.0
    %76 = vmatprep.subr.mxu0 0.0
    %77 = vmatpush1.msra.mxu0 0.0
    %78 = vmatprep.subr.mxu0 0.0
    %79 = vmatpush1.msra.mxu0 0.0
    %80 = vmatprep.subr.mxu0 0.0
    %81 = vmatpush1.msra.mxu0 0.0
    %82 = vmatprep.subr.mxu0 0.0
    %83 = vmatpush1.msra.mxu0 0.0
    %84 = vmatprep.subr.mxu0 0.0
    %85 = vmatpush1.msra.mxu0 0.0
    %86 = vmatprep.subr.mxu0 0.0
    %87 = vmatpush1.msra.mxu0 0.0
    %88 = vmatprep.subr.mxu0 0.0
    %89 = vmatpush1.msra.mxu0 0.0
    %90 = vmatprep.subr.mxu0 0.0
    %91 = vmatpush1.msra.mxu0 0.0
    %92 = vmatprep.subr.mxu0 0.0
    %93 = vmatpush1.msra.mxu0 0.0
    %94 = vmatprep.subr.mxu0 0.0
    %95 = vmatpush1.msra.mxu0 0.0
    %96 = vmatprep.subr.mxu0 0.0
    %97 = vmatpush1.msra.mxu0 0.0
    %98 = vmatprep.subr.mxu0 0.0
    %99 = vmatpush1.msra.mxu0 0.0
    %100 = vmatprep.subr.mxu0 0.0
    %101 = vmatpush1.msra.mxu0 0.0
    %102 = vmatprep.subr.mxu0 0.0
    %103 = vmatpush1.msra.mxu0 0.0
    %104 = vmatprep.subr.mxu0 0.0
    %105 = vmatpush1.msra.mxu0 0.0
    %106 = vmatprep.subr.mxu0 0.0
    %107 = vmatpush1.msra.mxu0 0.0
    %108 = vmatprep.subr.mxu0 0.0
    %109 = vmatpush1.msra.mxu0 0.0
    %110 = vmatprep.subr.mxu0 0.0
    %111 = vmatpush1.msra.mxu0 0.0
    %112 = vmatprep.subr.mxu0 0.0
    %113 = vmatpush1.msra.mxu0 0.0
    %114 = vmatprep.subr.mxu0 0.0
    %115 = vmatpush1.msra.mxu0 0.0
    %116 = vmatprep.subr.mxu0 0.0
    %117 = vmatpush1.msra.mxu0 0.0
    %118 = vmatprep.subr.mxu0 0.0
    %119 = vmatpush1.msra.mxu0 0.0
    %120 = vmatprep.subr.mxu0 0.0
    %121 = vmatpush1.msra.mxu0 0.0
    %122 = vmatprep.subr.mxu0 0.0
    %123 = vmatpush1.msra.mxu0 0.0
    %124 = vmatprep.subr.mxu0 0.0
    %125 = vmatpush1.msra.mxu0 0.0
    %126 = vmatprep.subr.mxu0 0.0
    %127 = vmatpush1.msra.mxu0 0.0
    %128 = vmatprep.subr.mxu0 0.0
    %129 = vmatpush1.msra.mxu0 0.0
    %130 = vmatprep.mubr.f32.mxu0 0.0
    %131 = vmatmul.mubr.f32.gmra.mrb[0].mxu0 %v64
    %v132 = vpop.f32.mrb[0].mxu0
    %v133 = vadd.f32 0.0, %v132
    %v134 = vpop.f32.mrb[0].mxu0
    %135 = vdwg.mxu0
    %vm136 = vcmask 130048
    %v138 = vsel %vm136, %v54, 0
    %140 = vmatprep.subr.mxu0 0.0
    %141 = vmatpush1.msra.mxu0 %v55
    %142 = vmatprep.subr.mxu0 0.0
    %143 = vmatpush1.msra.mxu0 %v56
    %144 = vmatprep.subr.mxu0 0.0
    %145 = vmatpush1.msra.mxu0 0.0
    %146 = vmatprep.subr.mxu0 0.0
    %147 = vmatpush1.msra.mxu0 0.0
    %148 = vmatprep.subr.mxu0 0.0
    %149 = vmatpush1.msra.mxu0 0.0
    %150 = vmatprep.subr.mxu0 0.0
    %151 = vmatpush1.msra.mxu0 0.0
    %152 = vmatprep.subr.mxu0 0.0
    %153 = vmatpush1.msra.mxu0 0.0
    %154 = vmatprep.subr.mxu0 0.0
    %155 = vmatpush1.msra.mxu0 0.0
    %156 = vmatprep.subr.mxu0 0.0
    %157 = vmatpush1.msra.mxu0 0.0
    %158 = vmatprep.subr.mxu0 0.0
    %159 = vmatpush1.msra.mxu0 0.0
    %160 = vmatprep.subr.mxu0 0.0
    %161 = vmatpush1.msra.mxu0 0.0
    %162 = vmatprep.subr.mxu0 0.0
    %163 = vmatpush1.msra.mxu0 0.0
    %164 = vmatprep.subr.mxu0 0.0
    %165 = vmatpush1.msra.mxu0 0.0
    %166 = vmatprep.subr.mxu0 0.0
    %167 = vmatpush1.msra.mxu0 0.0
    %168 = vmatprep.subr.mxu0 0.0
    %169 = vmatpush1.msra.mxu0 0.0
    %170 = vmatprep.subr.mxu0 0.0
    %171 = vmatpush1.msra.mxu0 0.0
    %172 = vmatprep.subr.mxu0 0.0
    %173 = vmatpush1.msra.mxu0 0.0
    %174 = vmatprep.subr.mxu0 0.0
    %175 = vmatpush1.msra.mxu0 0.0
    %176 = vmatprep.subr.mxu0 0.0
    %177 = vmatpush1.msra.mxu0 0.0
    %178 = vmatprep.subr.mxu0 0.0
    %179 = vmatpush1.msra.mxu0 0.0
    %180 = vmatprep.subr.mxu0 0.0
    %181 = vmatpush1.msra.mxu0 0.0
    %182 = vmatprep.subr.mxu0 0.0
    %183 = vmatpush1.msra.mxu0 0.0
    %184 = vmatprep.subr.mxu0 0.0
    %185 = vmatpush1.msra.mxu0 0.0
    %186 = vmatprep.subr.mxu0 0.0
    %187 = vmatpush1.msra.mxu0 0.0
    %188 = vmatprep.subr.mxu0 0.0
    %189 = vmatpush1.msra.mxu0 0.0
    %190 = vmatprep.subr.mxu0 0.0
    %191 = vmatpush1.msra.mxu0 0.0
    %192 = vmatprep.subr.mxu0 0.0
    %193 = vmatpush1.msra.mxu0 0.0
    %194 = vmatprep.subr.mxu0 0.0
    %195 = vmatpush1.msra.mxu0 0.0
    %196 = vmatprep.subr.mxu0 0.0
    %197 = vmatpush1.msra.mxu0 0.0
    %198 = vmatprep.subr.mxu0 0.0
    %199 = vmatpush1.msra.mxu0 0.0
    %200 = vmatprep.subr.mxu0 0.0
    %201 = vmatpush1.msra.mxu0 0.0
    %202 = vmatprep.subr.mxu0 0.0
    %203 = vmatpush1.msra.mxu0 0.0
    %204 = vmatprep.mubr.f32.mxu0 0.0
    %205 = vmatmul.mubr.f32.gmra.mrb[0].mxu0 %v138
    %v206 = vpop.f32.mrb[0].mxu0
    %v207 = vadd.f32 %v133, %v206
    %v208 = vpop.f32.mrb[0].mxu0
    %209 = vdwg.mxu0
    %v210 = vld [vmem:[#allocation5] sm:$0x1]
    %v212 = vlaneseq
    %v213 = vshrl.u32 %v212, 7
    %v214 = vsub.s32 0, %v213
    %v215 = vrot.slane %v210, %v214
    %v217 = vadd.f32 %v207, %v215
    %v218 = vtanh.pop %v217
    %vm219 = vcmask 254976
    %220 = vst.msk [vmem:[#allocation8] sm:$0x3] %vm219, %v218
    %v221 = vld [vmem:[%s5] sm:$0xff]
    %v222 = vld [vmem:[%s5 + $0x8] sm:$0xff]
    %v223 = vld [vmem:[%s5 + $0x10] sm:$0xff]
    %v224 = vld [vmem:[%s5 + $0x18] sm:$0xff]
    %v225 = vld [vmem:[%s6] sm:$0x1]
    %v227 = vlaneseq
    %v228 = vshrl.u32 %v227, 7
    %v229 = vsub.s32 0, %v228
    %v230 = vrot.slane %v225, %v229
    %v233 = vsel %vm62, %v218, 0
    %235 = vmatprep.subr.mxu0 0.0
    %236 = vmatpush1.msra.mxu0 %v221
    %237 = vmatprep.subr.mxu0 0.0
    %238 = vmatpush1.msra.mxu0 %v222
    %239 = vmatprep.subr.mxu0 0.0
    %240 = vmatpush1.msra.mxu0 %v223
    %241 = vmatprep.subr.mxu0 0.0
    %242 = vmatpush1.msra.mxu0 %v224
    %243 = vmatprep.subr.mxu0 0.0
    %244 = vmatpush1.msra.mxu0 0.0
    %245 = vmatprep.subr.mxu0 0.0
    %246 = vmatpush1.msra.mxu0 0.0
    %247 = vmatprep.subr.mxu0 0.0
    %248 = vmatpush1.msra.mxu0 0.0
    %249 = vmatprep.subr.mxu0 0.0
    %250 = vmatpush1.msra.mxu0 0.0
    %251 = vmatprep.subr.mxu0 0.0
    %252 = vmatpush1.msra.mxu0 0.0
    %253 = vmatprep.subr.mxu0 0.0
    %254 = vmatpush1.msra.mxu0 0.0
    %255 = vmatprep.subr.mxu0 0.0
    %256 = vmatpush1.msra.mxu0 0.0
    %257 = vmatprep.subr.mxu0 0.0
    %258 = vmatpush1.msra.mxu0 0.0
    %259 = vmatprep.subr.mxu0 0.0
    %260 = vmatpush1.msra.mxu0 0.0
    %261 = vmatprep.subr.mxu0 0.0
    %262 = vmatpush1.msra.mxu0 0.0
    %263 = vmatprep.subr.mxu0 0.0
    %264 = vmatpush1.msra.mxu0 0.0
    %265 = vmatprep.subr.mxu0 0.0
    %266 = vmatpush1.msra.mxu0 0.0
    %267 = vmatprep.subr.mxu0 0.0
    %268 = vmatpush1.msra.mxu0 0.0
    %269 = vmatprep.subr.mxu0 0.0
    %270 = vmatpush1.msra.mxu0 0.0
    %271 = vmatprep.subr.mxu0 0.0
    %272 = vmatpush1.msra.mxu0 0.0
    %273 = vmatprep.subr.mxu0 0.0
    %274 = vmatpush1.msra.mxu0 0.0
    %275 = vmatprep.subr.mxu0 0.0
    %276 = vmatpush1.msra.mxu0 0.0
    %277 = vmatprep.subr.mxu0 0.0
    %278 = vmatpush1.msra.mxu0 0.0
    %279 = vmatprep.subr.mxu0 0.0
    %280 = vmatpush1.msra.mxu0 0.0
    %281 = vmatprep.subr.mxu0 0.0
    %282 = vmatpush1.msra.mxu0 0.0
    %283 = vmatprep.subr.mxu0 0.0
    %284 = vmatpush1.msra.mxu0 0.0
    %285 = vmatprep.subr.mxu0 0.0
    %286 = vmatpush1.msra.mxu0 0.0
    %287 = vmatprep.subr.mxu0 0.0
    %288 = vmatpush1.msra.mxu0 0.0
    %289 = vmatprep.subr.mxu0 0.0
    %290 = vmatpush1.msra.mxu0 0.0
    %291 = vmatprep.subr.mxu0 0.0
    %292 = vmatpush1.msra.mxu0 0.0
    %293 = vmatprep.subr.mxu0 0.0
    %294 = vmatpush1.msra.mxu0 0.0
    %295 = vmatprep.subr.mxu0 0.0
    %296 = vmatpush1.msra.mxu0 0.0
    %297 = vmatprep.subr.mxu0 0.0
    %298 = vmatpush1.msra.mxu0 0.0
    %299 = vmatprep.mubr.f32.mxu0 0.0
    %300 = vmatmul.mubr.f32.gmra.mrb[0].mxu0 %v233
    %v301 = vpop.f32.mrb[0].mxu0
    %v302 = vadd.f32 %v230, %v301
    %v303 = vpop.f32.mrb[0].mxu0
    %304 = vdwg.mxu0
    %vm305 = vcmask 58368
    %v306 = vsel %vm305, %v302, -inf
    %307 = vmax.xlane.f32.xlu0 %v306
    %v308 = vpop.xlane.xlu0 %307
    %v309 = vsub.f32 %v302, %v308
    %v310 = vmul.f32 %v309, 1.442695
    %v311 = vpow.pop %v310
    %v312 = vsel %vm305, %v311, 0.0
    %313 = vadd.xlane.f32.xlu0 %v312
    %v314 = vpop.xlane.xlu0 %313
    %v315 = vlog2.pop %v314
    %v316 = vmul.f32 %v315, 0.6931472
    %v317 = vsub.f32 %v309, %v316
    %318 = vst.msk [vmem:[#allocation7] sm:$0x3] %vm305, %v317
    // Predicated region
    $region38: #{tpu_custom_call.1} parent=1 // pred_check
      _
    $region39: #{tpu_custom_call.1} parent=1 // pred_check_branch
      %320 = sbr.rel (0) target = $region41
    $region40: #{tpu_custom_call.1} parent=1 // pred_region
      %s322 = ssub.s32 32, 32
      %323 = vsyncadd [#allocation4], %s322
      %s325 = sshll.u32 [#allocation7], 4
      %s326 = int_to_ptr.vmem [resolvable:$true] %s325
      %328 = dma.vmem_to_hbm [thread:$0]  %s326, 32, %s7, [#allocation4]
    $region41: #{tpu_custom_call.1} parent=1 // pred_fallthru
      _
    // Predicated region
    $region42: #{tpu_custom_call.1} parent=1 // pred_check
      _
    $region43: #{tpu_custom_call.1} parent=1 // pred_check_branch
      %330 = sbr.rel (0) target = $region45
    $region44: #{tpu_custom_call.1} parent=1 // pred_region
      %s332 = ssub.s32 32, 32
      %333 = vsyncadd [#allocation9], %s332
      %s335 = sshll.u32 [#allocation8], 4
      %s336 = int_to_ptr.vmem [resolvable:$true] %s335
      %338 = dma.vmem_to_hbm [thread:$0]  %s336, 32, %s8, [#allocation9]
    $region45: #{tpu_custom_call.1} parent=1 // pred_fallthru
      _
    // Predicated region
    $region46: #{tpu_custom_call.1} parent=1 // pred_check
      _
    $region47: #{tpu_custom_call.1} parent=1 // pred_check_branch
      %340 = sbr.rel (0) target = $region49
    $region48: #{tpu_custom_call.1} parent=1 // pred_region
      %341 = dma.done [#allocation4], 32
    $region49: #{tpu_custom_call.1} parent=1 // pred_fallthru
      _
    // Predicated region
    $region50: #{tpu_custom_call.1} parent=1 // pred_check
      _
    $region51: #{tpu_custom_call.1} parent=1 // pred_check_branch
      %343 = sbr.rel (0) target = $region53
    $region52: #{tpu_custom_call.1} parent=1 // pred_region
      %344 = dma.done [#allocation9], 32
    $region53: #{tpu_custom_call.1} parent=1 // pred_fallthru
      _
    %345 = vsyncpa [#allocation3], 1
    %346 = vsyncpa [#allocation6], 1
    %347 = vsyncpa [#allocation4], 1
    %348 = vsyncpa [#allocation9], 1

</llo_original>
